<compile_context>
chip_gen: v5e
topology: v5e:2x2
jax: 0.10.0
libtpu: 0.0.40
codegen_flags: <defaults>
</compile_context>

<pallas_src>
import jax
import jax.numpy as jnp
from jax.experimental import pallas as pl
from jax.experimental.pallas import tpu as pltpu


def _conv3x3_matmul_kernel(w_ref, p_ref, o_ref):
    # w_ref: (Cout, 9*Cin)      bf16 flattened conv weight, resident across grid
    # p_ref: (B, 9*Cin, tileN)  bf16 im2col patches, lane-dense spatial tile
    # o_ref: (B, Cout, tileN)   lane-dense output slab (model dtype)
    w = w_ref[...]
    for b in range(p_ref.shape[0]):          # static unroll; B is tiny
        o_ref[b, :, :] = jnp.dot(
            w, p_ref[b, :, :], preferred_element_type=jnp.float32
        ).astype(o_ref.dtype)


def _num_lane_tiles(n_lanes):
    """2 parallel spatial tiles on 2-TensorCore chips (v7x); 1 big step on
    single-TC chips (v5e/v6e) so no per-grid-step overhead is paid."""
    try:
        kind = jax.devices()[0].device_kind.lower()
        multi_tc = ("v7" in kind) or ("7x" in kind)
    except Exception:
        multi_tc = False
    if multi_tc and n_lanes % 256 == 0:       # two >=128-lane, 128-aligned tiles
        return 2
    return 1


def overlap_patch_embed(x_nchw, weight):
    """x_nchw: (B, Cin, H, W); weight: (Cout, Cin, 3, 3) (PyTorch conv layout).
    Returns (B, Cout, H, W) == nn.Conv2d(in_c, embed_dim, 3, 1, 1, bias=False)."""
    B, Cin, H, W = x_nchw.shape
    Cout = weight.shape[0]
    K = 9 * Cin          # contraction dim after im2col
    N = H * W            # lane dim

    # --- wrapper glue (tiny at this size; fuses into one XLA producer) ------
    # im2col with K index = c*9 + dy*3 + dx  ==  weight.reshape(Cout, Cin*9),
    # so the PyTorch weight needs no transpose.
    # TODO(synk): for production SegFormer-sized inputs, build the 9 taps inside
    # the kernel from a halo'd (Cin, tileH+2, W+2) VMEM tile (pltpu.roll lane
    # shifts / shifted-view dots into an f32 accumulator) instead of
    # materializing a 9x patches tensor in HBM, and re-derive tile sizes for
    # v7x's 64 MiB VMEM (vmem_limit_bytes with headroom).
    x_pad = jnp.pad(x_nchw, ((0, 0), (0, 0), (1, 1), (1, 1)))        # (B,Cin,H+2,W+2)
    patches = jnp.stack(
        [x_pad[:, :, dy:dy + H, dx:dx + W] for dy in range(3) for dx in range(3)],
        axis=2,
    )                                                                # (B,Cin,9,H,W)
    patches = patches.reshape(B, K, N).astype(jnp.bfloat16)          # (B,9*Cin,H*W)
    w_mat = weight.reshape(Cout, K).astype(jnp.bfloat16)             # no transpose

    n_tiles = _num_lane_tiles(N)
    tile_n = N // n_tiles

    cost = pl.CostEstimate(
        flops=2 * B * N * K * Cout,
        transcendentals=0,
        bytes_accessed=(B * K * N + Cout * K) * 2                    # bf16 inputs
        + B * Cout * N * jnp.dtype(x_nchw.dtype).itemsize,
    )

    out = pl.pallas_call(
        _conv3x3_matmul_kernel,
        out_shape=jax.ShapeDtypeStruct((B, Cout, N), x_nchw.dtype),
        grid_spec=pltpu.PrefetchScalarGridSpec(
            num_scalar_prefetch=0,
            grid=(n_tiles,),
            in_specs=[
                # weight: resident across the (spatial-tile) grid
                pl.BlockSpec((Cout, K), lambda n: (0, 0)),
                # all batch elements, one lane-dense spatial tile per step
                pl.BlockSpec((B, K, tile_n), lambda n: (0, 0, n)),
            ],
            out_specs=pl.BlockSpec((B, Cout, tile_n), lambda n: (0, 0, n)),
        ),
        compiler_params=pltpu.CompilerParams(
            dimension_semantics=("parallel",)),   # both TCs on v7x when n_tiles>1
        cost_estimate=cost,
    )(w_mat, patches)

    # Pure row-major view: (B, Cout, H*W) -> (B, Cout, H, W). No data movement.
    return out.reshape(B, Cout, H, W)


if __name__ == "__main__":
    # Small shapes consistent with the module: in_c=4, embed_dim=32, 16x16 spatial.
    B, Cin, H, W = 2, 4, 16, 16
    Cout = 32

    key = jax.random.PRNGKey(0)
    kx, kw = jax.random.split(key)
    x = jax.random.normal(kx, (B, Cin, H, W), dtype=jnp.float32)
    # Deterministic synthetic weight (PyTorch conv layout: (Cout, Cin, kH, kW)).
    fan_in = Cin * 3 * 3
    bound = 1.0 / (fan_in ** 0.5)
    weight = jax.random.uniform(kw, (Cout, Cin, 3, 3),
                                minval=-bound, maxval=bound, dtype=jnp.float32)

    out = overlap_patch_embed(x, weight)
    jax.block_until_ready(out)
    assert out.shape == (B, Cout, H, W)

    # Reference with matching bf16-operand / f32-accumulation numerics.
    ref_bf16 = jax.lax.conv_general_dilated(
        x.astype(jnp.bfloat16), weight.astype(jnp.bfloat16),
        window_strides=(1, 1), padding=((1, 1), (1, 1)),
        dimension_numbers=("NCHW", "OIHW", "NCHW"),
        preferred_element_type=jnp.float32).astype(x.dtype)
    assert jnp.allclose(out, ref_bf16, atol=1e-2, rtol=1e-2)

    # Full-precision reference; error bounded by the bf16 operand cast.
    ref_f32 = jax.lax.conv_general_dilated(
        x, weight, window_strides=(1, 1), padding=((1, 1), (1, 1)),
        dimension_numbers=("NCHW", "OIHW", "NCHW"))
    assert jnp.allclose(out, ref_f32, atol=5e-2, rtol=5e-2)

    print("KERNEL_OK")
</pallas_src>

<mosaic_0001>
module attributes {stable_mosaic.version = 11 : i64} {
  func.func @_conv3x3_matmul_kernel(%arg0: i32, %arg1: memref<32x36xbf16, #tpu.memory_space<vmem>>, %arg2: memref<2x36x256xbf16, #tpu.memory_space<vmem>>, %arg3: memref<2x32x256xf32, #tpu.memory_space<vmem>>) attributes {dimension_semantics = [#tpu.dimension_semantics<parallel>], iteration_bounds = array<i64: 1>, scalar_prefetch = 0 : i64, scratch_operands = 0 : i64, tpu.core_type = #tpu.core_type<tc>, window_params = [{pipeline_mode = #tpu.pipeline_mode<synchronous>, transform_indices = @transform_0, window_bounds = array<i64: 32, 36>}, {transform_indices = @transform_1, window_bounds = array<i64: 2, 36, 256>}, {transform_indices = @transform_2, window_bounds = array<i64: 2, 32, 256>}]} {
    %c0 = arith.constant 0 : index
    %c0_0 = arith.constant 0 : index
    %0 = vector.load %arg1[%c0, %c0_0] : memref<32x36xbf16, #tpu.memory_space<vmem>>, vector<32x36xbf16>
    %c0_1 = arith.constant 0 : index
    %c0_2 = arith.constant 0 : index
    %c0_3 = arith.constant 0 : index
    %1 = vector.load %arg2[%c0_1, %c0_2, %c0_3] : memref<2x36x256xbf16, #tpu.memory_space<vmem>>, vector<1x36x256xbf16>
    %2 = vector.shape_cast %1 : vector<1x36x256xbf16> to vector<36x256xbf16>
    %cst = arith.constant dense<0.000000e+00> : vector<32x256xf32>
    %3 = tpu.matmul %0, %2, %cst {dimension_numbers = #tpu.dot_dimension_numbers<[1], [0], [0], [1], [0, 0, 1, 1], [], []>} : vector<32x36xbf16>, vector<36x256xbf16>, vector<32x256xf32> -> vector<32x256xf32>
    %c0_4 = arith.constant 0 : index
    %c0_5 = arith.constant 0 : index
    %c0_6 = arith.constant 0 : index
    %4 = vector.load %arg3[%c0_4, %c0_5, %c0_6] : memref<2x32x256xf32, #tpu.memory_space<vmem>>, vector<1x32x256xf32>
    %5 = vector.shape_cast %4 : vector<1x32x256xf32> to vector<32x256xf32>
    %6 = vector.shape_cast %3 : vector<32x256xf32> to vector<1x32x256xf32>
    tpu.vector_store %arg3[%c0_4, %c0_5, %c0_6], %6 {strides = array<i32>} : memref<2x32x256xf32, #tpu.memory_space<vmem>>, vector<1x32x256xf32>,
    %c1 = arith.constant 1 : index
    %c0_7 = arith.constant 0 : index
    %c0_8 = arith.constant 0 : index
    %7 = vector.load %arg2[%c1, %c0_7, %c0_8] : memref<2x36x256xbf16, #tpu.memory_space<vmem>>, vector<1x36x256xbf16>
    %8 = vector.shape_cast %7 : vector<1x36x256xbf16> to vector<36x256xbf16>
    %cst_9 = arith.constant dense<0.000000e+00> : vector<32x256xf32>
    %9 = tpu.matmul %0, %8, %cst_9 {dimension_numbers = #tpu.dot_dimension_numbers<[1], [0], [0], [1], [0, 0, 1, 1], [], []>} : vector<32x36xbf16>, vector<36x256xbf16>, vector<32x256xf32> -> vector<32x256xf32>
    %c1_10 = arith.constant 1 : index
    %c0_11 = arith.constant 0 : index
    %c0_12 = arith.constant 0 : index
    %10 = vector.load %arg3[%c1_10, %c0_11, %c0_12] : memref<2x32x256xf32, #tpu.memory_space<vmem>>, vector<1x32x256xf32>
    %11 = vector.shape_cast %10 : vector<1x32x256xf32> to vector<32x256xf32>
    %12 = vector.shape_cast %9 : vector<32x256xf32> to vector<1x32x256xf32>
    tpu.vector_store %arg3[%c1_10, %c0_11, %c0_12], %12 {strides = array<i32>} : memref<2x32x256xf32, #tpu.memory_space<vmem>>, vector<1x32x256xf32>,
    return
  }
  func.func @transform_0(%arg0: i32) -> (i32, i32) {
    %c0_i32 = arith.constant 0 : i32
    %c0_i32_0 = arith.constant 0 : i32
    %c0_i32_1 = arith.constant 0 : i32
    return %c0_i32, %c0_i32_0 : i32, i32
  }
  func.func @transform_1(%arg0: i32) -> (i32, i32, i32) {
    %c0_i32 = arith.constant 0 : i32
    %c0_i32_0 = arith.constant 0 : i32
    %c0_i32_1 = arith.constant 0 : i32
    return %c0_i32, %c0_i32_0, %arg0 : i32, i32, i32
  }
  func.func @transform_2(%arg0: i32) -> (i32, i32, i32) {
    %c0_i32 = arith.constant 0 : i32
    %c0_i32_0 = arith.constant 0 : i32
    %c0_i32_1 = arith.constant 0 : i32
    return %c0_i32, %c0_i32_0, %arg0 : i32, i32, i32
  }
}

</mosaic_0001>

<llo_original>
// kernel: tpu_custom_call.1
$region0: #{tpu_custom_call.1}
  #allocation0 [shape = 'u32[]', space=smem, size = 0x4, offset = 0x4, fixed_abs, tag = 'smem constant byte address 0x4 - core index']
  #allocation1 [shape = 'u32[72,128]{1,0:T(1,128)}', space=vmem, size = 0x9000, scoped, tag = 'internal scratch']
  %s0 = inlined_call_operand.vmem [shape: bf16[32,36], index: 0, kind: input, shape index: {}]
  %s1 = inlined_call_operand.vmem [shape: bf16[2,36,256], index: 1, kind: input, shape index: {}]
  %s2 = inlined_call_operand.hbm [shape: f32[2,32,256], index: 2, kind: output, shape index: {}]
  %s3 = sld [smem:[#allocation0]]
  $region18: #{tpu_custom_call.1} parent=0
    _
  %s5 = ssub.s32 1, %s3
  %s6 = scalar_select 0, %s5, %s3
  $region1: #{tpu_custom_call.1} parent=0
    #allocation2 [shape = 'u8[65536]{0}', space=vmem, size = 0x10000, scoped, tag = 'output window, operand 0, single buffered']
    #allocation3 [shape = 's32[1]{0}', space=sflag, size = 0x4, scoped, tag = 'scoped memory for tpu_custom_call.1']
    %7 = vsyncpa [#allocation3], 0
    // Predicated region
    $region2: #{tpu_custom_call.1} parent=1 // pred_check
      _
    $region3: #{tpu_custom_call.1} parent=1 // pred_check_branch
      %9 = sbr.rel (0) target = $region5
    $region4: #{tpu_custom_call.1} parent=1 // pred_region
      _
    $region5: #{tpu_custom_call.1} parent=1 // pred_fallthru
      _
    // Predicated region
    $region6: #{tpu_custom_call.1} parent=1 // pred_check
      _
    $region7: #{tpu_custom_call.1} parent=1 // pred_check_branch
      %11 = sbr.rel (0) target = $region9
    $region8: #{tpu_custom_call.1} parent=1 // pred_region
      _
    $region9: #{tpu_custom_call.1} parent=1 // pred_fallthru
      _
    %v13 = vld [vmem:[%s0] sm:$0xf]
    %v14 = vld [vmem:[%s0 + $0x4] sm:$0xf]
    %v15 = vld [vmem:[%s0 + $0x8] sm:$0xf]
    %v16 = vld [vmem:[%s0 + $0xc] sm:$0xf]
    %v17 = vld [vmem:[%s1] sm:$0xff]
    %v18 = vld [vmem:[%s1 + $0x8] sm:$0xff]
    %v19 = vld [vmem:[%s1 + $0x10] sm:$0xff]
    %v20 = vld [vmem:[%s1 + $0x18] sm:$0xff]
    %v21 = vld [vmem:[%s1 + $0x20] sm:$0x33]
    %v26 = vunpack.c.l.b16 %v13
    %v27 = vunpack.c.l.b16 %v14
    %v28 = vunpack.c.l.b16 %v15
    %v29 = vunpack.c.l.b16 %v16
    %v30 = vpack.c.b16 %v27, %v26
    %v31 = vpack.c.b16 %v29, %v28
    %v37 = vunpack.c.l.b16 %v17
    %v38 = vunpack.c.h.b16 %v17
    %v39 = vunpack.c.l.b16 %v18
    %v40 = vunpack.c.h.b16 %v18
    %v41 = vunpack.c.l.b16 %v19
    %v42 = vunpack.c.h.b16 %v19
    %v43 = vunpack.c.l.b16 %v20
    %v44 = vunpack.c.h.b16 %v20
    %v45 = vunpack.c.l.b16 %v21
    %v46 = vunpack.c.h.b16 %v21
    %v47 = vpack.c.b16 %v39, %v37
    %v48 = vpack.c.b16 %v40, %v38
    %v49 = vpack.c.b16 %v43, %v41
    %v50 = vpack.c.b16 %v44, %v42
    %v51 = vpack.c.b16 %v45, %v45
    %v52 = vpack.c.b16 %v46, %v46
    %vm57 = vcmask 293888
    %v59 = vsel %vm57, %v30, 0
    %v62 = vsel %vm57, %v31, 0
    %vm64 = vcmask 1041408
    %v66 = vsel %vm64, %v51, 0
    %v69 = vsel %vm64, %v52, 0
    %71 = vmatpush.bf16.msra.mxu0 0
    %72 = vmatpush.bf16.msra.mxu0 0
    %73 = vmatpush.bf16.msra.mxu0 0
    %74 = vmatpush.bf16.msra.mxu0 0
    %75 = vmatpush.bf16.msra.mxu0 0
    %76 = vmatpush.bf16.msra.mxu0 %v66
    %77 = vmatpush.bf16.msra.mxu0 %v49
    %78 = vmatpush.bf16.msra.mxu0 %v47
    %79 = vmatmul.bf16.gmra.mxu0 %v59
    %v80 = vpop.f32.mrf.mxu0
    %v81 = vadd.f32 0.0, %v80
    %v82 = vpop.f32.mrf.mxu0
    %v83 = vadd.f32 0.0, %v82
    %84 = vmatmul.bf16.gmra.mxu0 %v62
    %v85 = vpop.f32.mrf.mxu0
    %v86 = vadd.f32 0.0, %v85
    %v87 = vpop.f32.mrf.mxu0
    %v88 = vadd.f32 0.0, %v87
    %89 = vdwg.mxu0
    %90 = vmatpush.bf16.msra.mxu0 0
    %91 = vmatpush.bf16.msra.mxu0 0
    %92 = vmatpush.bf16.msra.mxu0 0
    %93 = vmatpush.bf16.msra.mxu0 0
    %94 = vmatpush.bf16.msra.mxu0 0
    %95 = vmatpush.bf16.msra.mxu0 %v69
    %96 = vmatpush.bf16.msra.mxu0 %v50
    %97 = vmatpush.bf16.msra.mxu0 %v48
    %98 = vmatmul.bf16.gmra.mxu0 %v59
    %v99 = vpop.f32.mrf.mxu0
    %v100 = vadd.f32 0.0, %v99
    %v101 = vpop.f32.mrf.mxu0
    %v102 = vadd.f32 0.0, %v101
    %103 = vmatmul.bf16.gmra.mxu0 %v62
    %v104 = vpop.f32.mrf.mxu0
    %v105 = vadd.f32 0.0, %v104
    %v106 = vpop.f32.mrf.mxu0
    %v107 = vadd.f32 0.0, %v106
    %108 = vdwg.mxu0
    %109 = vst [vmem:[#allocation2] sm:$0xff] %v81
    %110 = vst [vmem:[#allocation2 + $0x8] sm:$0xff] %v100
    %111 = vst [vmem:[#allocation2 + $0x10] sm:$0xff] %v83
    %112 = vst [vmem:[#allocation2 + $0x18] sm:$0xff] %v102
    %113 = vst [vmem:[#allocation2 + $0x20] sm:$0xff] %v86
    %114 = vst [vmem:[#allocation2 + $0x28] sm:$0xff] %v105
    %115 = vst [vmem:[#allocation2 + $0x30] sm:$0xff] %v88
    %116 = vst [vmem:[#allocation2 + $0x38] sm:$0xff] %v107
    %s117 = scalar_lea.vmem %s1, 40
    %v118 = vld [vmem:[%s117] sm:$0xff]
    %v119 = vld [vmem:[%s117 + $0x8] sm:$0xff]
    %v120 = vld [vmem:[%s117 + $0x10] sm:$0xff]
    %v121 = vld [vmem:[%s117 + $0x18] sm:$0xff]
    %v122 = vld [vmem:[%s117 + $0x20] sm:$0x33]
    %v128 = vunpack.c.l.b16 %v118
    %v129 = vunpack.c.h.b16 %v118
    %v130 = vunpack.c.l.b16 %v119
    %v131 = vunpack.c.h.b16 %v119
    %v132 = vunpack.c.l.b16 %v120
    %v133 = vunpack.c.h.b16 %v120
    %v134 = vunpack.c.l.b16 %v121
    %v135 = vunpack.c.h.b16 %v121
    %v136 = vunpack.c.l.b16 %v122
    %v137 = vunpack.c.h.b16 %v122
    %v138 = vpack.c.b16 %v130, %v128
    %v139 = vpack.c.b16 %v131, %v129
    %v140 = vpack.c.b16 %v134, %v132
    %v141 = vpack.c.b16 %v135, %v133
    %v142 = vpack.c.b16 %v136, %v136
    %v143 = vpack.c.b16 %v137, %v137
    %v149 = vsel %vm64, %v142, 0
    %v152 = vsel %vm64, %v143, 0
    %154 = vmatpush.bf16.msra.mxu0 0
    %155 = vmatpush.bf16.msra.mxu0 0
    %156 = vmatpush.bf16.msra.mxu0 0
    %157 = vmatpush.bf16.msra.mxu0 0
    %158 = vmatpush.bf16.msra.mxu0 0
    %159 = vmatpush.bf16.msra.mxu0 %v149
    %160 = vmatpush.bf16.msra.mxu0 %v140
    %161 = vmatpush.bf16.msra.mxu0 %v138
    %162 = vmatmul.bf16.gmra.mxu0 %v59
    %v163 = vpop.f32.mrf.mxu0
    %v164 = vadd.f32 0.0, %v163
    %v165 = vpop.f32.mrf.mxu0
    %v166 = vadd.f32 0.0, %v165
    %167 = vmatmul.bf16.gmra.mxu0 %v62
    %v168 = vpop.f32.mrf.mxu0
    %v169 = vadd.f32 0.0, %v168
    %v170 = vpop.f32.mrf.mxu0
    %v171 = vadd.f32 0.0, %v170
    %172 = vdwg.mxu0
    %173 = vmatpush.bf16.msra.mxu0 0
    %174 = vmatpush.bf16.msra.mxu0 0
    %175 = vmatpush.bf16.msra.mxu0 0
    %176 = vmatpush.bf16.msra.mxu0 0
    %177 = vmatpush.bf16.msra.mxu0 0
    %178 = vmatpush.bf16.msra.mxu0 %v152
    %179 = vmatpush.bf16.msra.mxu0 %v141
    %180 = vmatpush.bf16.msra.mxu0 %v139
    %181 = vmatmul.bf16.gmra.mxu0 %v59
    %v182 = vpop.f32.mrf.mxu0
    %v183 = vadd.f32 0.0, %v182
    %v184 = vpop.f32.mrf.mxu0
    %v185 = vadd.f32 0.0, %v184
    %186 = vmatmul.bf16.gmra.mxu0 %v62
    %v187 = vpop.f32.mrf.mxu0
    %v188 = vadd.f32 0.0, %v187
    %v189 = vpop.f32.mrf.mxu0
    %v190 = vadd.f32 0.0, %v189
    %191 = vdwg.mxu0
    %s192 = scalar_lea.vmem [#allocation2], 64
    %193 = vst [vmem:[%s192] sm:$0xff] %v164
    %194 = vst [vmem:[%s192 + $0x8] sm:$0xff] %v183
    %195 = vst [vmem:[%s192 + $0x10] sm:$0xff] %v166
    %196 = vst [vmem:[%s192 + $0x18] sm:$0xff] %v185
    %197 = vst [vmem:[%s192 + $0x20] sm:$0xff] %v169
    %198 = vst [vmem:[%s192 + $0x28] sm:$0xff] %v188
    %199 = vst [vmem:[%s192 + $0x30] sm:$0xff] %v171
    %200 = vst [vmem:[%s192 + $0x38] sm:$0xff] %v190
    // Predicated region
    $region10: #{tpu_custom_call.1} parent=1 // pred_check
      _
    $region11: #{tpu_custom_call.1} parent=1 // pred_check_branch
      %202 = sbr.rel (0) target = $region13
    $region12: #{tpu_custom_call.1} parent=1 // pred_region
      %204 = vsyncadd [#allocation3], 0
      %s205 = sshll.u32 [#allocation2], 4
      %s206 = int_to_ptr.vmem [resolvable:$true] %s205
      %s207 = sshll.u32 %s2, 4
      %s208 = int_to_ptr.hbm [resolvable:$true] %s207
      %213 = dma.vmem_to_hbm [thread:$0]  %s206, 2048, %s208, [#allocation3], 256, 256, 16
    $region13: #{tpu_custom_call.1} parent=1 // pred_fallthru
      _
    // Predicated region
    $region14: #{tpu_custom_call.1} parent=1 // pred_check
      _
    $region15: #{tpu_custom_call.1} parent=1 // pred_check_branch
      %215 = sbr.rel (0) target = $region17
    $region16: #{tpu_custom_call.1} parent=1 // pred_region
      %217 = dma.done [#allocation3], 2048
    $region17: #{tpu_custom_call.1} parent=1 // pred_fallthru
      _
    %218 = vsyncpa [#allocation3], 1

</llo_original>
